<compile_context>
chip_gen: v7x
topology: tpu7x:2x2x1
jax: 0.10.0
libtpu: 0.0.40
codegen_flags: <defaults>
</compile_context>

<pallas_src>
import jax
import jax.numpy as jnp
from jax.experimental import pallas as pl
from jax.experimental.pallas import tpu as pltpu


def mlp_attention_kernel(x_ref, wf_ref, len_ref, p_ref, attn_ref):
    # x_ref   : (BB, S, H) f32  batch block of inputs
    # wf_ref  : (1, H)     f32  fused projection vector (w_v @ W_w)
    # len_ref : (BB, 1)    i32  sequence lengths for this batch block
    # p_ref   : (BB, S)    f32  per-step output block (normalized attn scores)
    # attn_ref: (S, H)     f32  resident accumulator output (sum over batch)
    b = pl.program_id(0)

    @pl.when(b == 0)
    def _init():
        attn_ref[...] = jnp.zeros_like(attn_ref)

    x = x_ref[...]                                       # (BB, S, H)
    wf = wf_ref[...]                                     # (1, H)
    bb, s, _ = x.shape

    # Fused projection: scores[i, t] = <x[i, t, :], wf>  (VPU mul + lane reduce)
    scores = jnp.sum(x * wf, axis=-1)                    # (BB, S)

    # Length-masked, numerically stable softmax over the sequence axis.
    # NOTE: a row with length == 0 yields NaN, matching the PyTorch reference
    # (softmax of an all -inf row); guard upstream if that can happen.
    lengths = len_ref[...]                               # (BB, 1) i32
    idx = jax.lax.broadcasted_iota(jnp.int32, (bb, s), 1)
    masked = jnp.where(idx < lengths, scores, jnp.float32(-jnp.inf))
    m = jnp.max(masked, axis=-1, keepdims=True)
    e = jnp.exp(masked - m)
    denom = jnp.sum(e, axis=-1, keepdims=True)
    p = e * pl.reciprocal(denom, approx=True)            # (BB, S), EUP reciprocal
    p_ref[...] = p

    # attn_x = sum_b x[b] * p[b, :, None] -> (S, H), accumulated across steps.
    attn_ref[...] += jnp.sum(x * p[:, :, None], axis=0)


def mlp_attention(x, x_lengths, w_w, b_w, w_v, *, batch_block=8):
    """x: (B,S,H); x_lengths: (B,) int; w_w: (A,H) proj_w.weight;
    b_w: (A,) proj_w.bias; w_v: (1,A) proj_v.weight (no bias)."""
    x = jnp.asarray(x, jnp.float32)
    B, S, H = x.shape
    w_w = jnp.asarray(w_w, jnp.float32)
    w_v = jnp.asarray(w_v, jnp.float32)

    # Algebraic fusion of the two linear layers (no activation in between):
    #   scores = (x @ W_w^T + b_w) @ w_v^T = x @ (w_v @ W_w)^T + (b_w @ w_v^T)
    # The constant shifts every (unmasked) score in a row equally, so it cannot
    # change the softmax output -> dropped exactly.
    wf = (w_v @ w_w).reshape(1, H)                           # (1, H)
    lens = jnp.asarray(x_lengths, jnp.int32).reshape(B, 1)   # (B, 1)

    # Batch blocking: BB rows per grid step.  Pad B to a multiple of BB; padded
    # rows use zero inputs + full length S, so their softmax is finite and
    # their contribution to attn_x is exactly zero (0 * p == 0).
    BB = B if B <= batch_block else batch_block
    Bp = pl.cdiv(B, BB) * BB
    if Bp != B:
        x = jnp.pad(x, ((0, Bp - B), (0, 0), (0, 0)))
        lens = jnp.pad(lens, ((0, Bp - B), (0, 0)), constant_values=S)

    grid_spec = pltpu.PrefetchScalarGridSpec(
        num_scalar_prefetch=0,
        grid=(Bp // BB,),
        in_specs=[
            pl.BlockSpec((BB, S, H), lambda b: (b, 0, 0)),  # x: one batch block
            pl.BlockSpec((1, H), lambda b: (0, 0)),         # fused weight
            pl.BlockSpec((BB, 1), lambda b: (b, 0)),        # lengths block
        ],
        out_specs=[
            pl.BlockSpec((BB, S), lambda b: (b, 0)),        # p: per-step writeback
            pl.BlockSpec((S, H), lambda b: (0, 0)),         # attn: resident acc
        ],
    )

    out_shapes = (jax.ShapeDtypeStruct((Bp, S), jnp.float32),
                  jax.ShapeDtypeStruct((S, H), jnp.float32))

    p, attn = pl.pallas_call(
        mlp_attention_kernel,
        out_shape=out_shapes,
        grid_spec=grid_spec,
        compiler_params=pltpu.CompilerParams(
            dimension_semantics=("arbitrary",)),  # attn_x accumulates over batch
    )(x, wf, lens)
    return p[:B], attn


def reference(x, x_lengths, w_w, b_w, w_v):
    """Plain-JAX mirror of the PyTorch forward (for correctness check)."""
    B, S, H = x.shape
    mlp = x.reshape(-1, H) @ w_w.T + b_w                    # (B*S, A)
    scores = (mlp @ w_v.T).reshape(B, S)                    # (B, S)
    mask = jnp.arange(S)[None, :] < x_lengths[:, None]
    scores = jnp.where(mask, scores, -jnp.inf)
    p = jax.nn.softmax(scores, axis=-1)
    attn = jnp.sum(x * p[:, :, None], axis=0)               # (S, H) -- sum over batch
    return p, attn


if __name__ == "__main__":
    B, S, H, A = 2, 8, 32, 16          # batch, seq, hidden_dim, attention_dim

    key = jax.random.PRNGKey(0)
    k_x, k_w, k_b, k_v = jax.random.split(key, 4)
    x = jax.random.normal(k_x, (B, S, H), jnp.float32)
    w_w = jax.random.normal(k_w, (A, H), jnp.float32) * 0.1   # proj_w.weight
    b_w = jax.random.normal(k_b, (A,), jnp.float32) * 0.1     # proj_w.bias
    w_v = jax.random.normal(k_v, (1, A), jnp.float32) * 0.1   # proj_v.weight
    # max length == S so the PyTorch mask shape [B, max_len] matches scores [B, S]
    x_lengths = jnp.array([S, 5], jnp.int32)

    p, attn_x = mlp_attention(x, x_lengths, w_w, b_w, w_v)
    jax.block_until_ready((p, attn_x))

    p_ref, attn_ref = reference(x, x_lengths, w_w, b_w, w_v)
    assert p.shape == (B, S) and attn_x.shape == (S, H)
    # Tolerance loosened slightly for the approximate EUP reciprocal.
    assert jnp.allclose(p, p_ref, atol=2e-3, rtol=2e-3)
    assert jnp.allclose(attn_x, attn_ref, atol=2e-3, rtol=2e-3)

    print("KERNEL_OK")
</pallas_src>

<mosaic_0001>
module attributes {stable_mosaic.version = 11 : i64} {
  func.func @mlp_attention_kernel(%arg0: i32, %arg1: memref<2x8x32xf32, #tpu.memory_space<vmem>>, %arg2: memref<1x32xf32, #tpu.memory_space<vmem>>, %arg3: memref<2x1xi32, #tpu.memory_space<vmem>>, %arg4: memref<2x8xf32, #tpu.memory_space<vmem>>, %arg5: memref<8x32xf32, #tpu.memory_space<vmem>>) attributes {dimension_semantics = [#tpu.dimension_semantics<arbitrary>], iteration_bounds = array<i64: 1>, scalar_prefetch = 0 : i64, scratch_operands = 0 : i64, tpu.core_type = #tpu.core_type<tc>, window_params = [{transform_indices = @transform_0, window_bounds = array<i64: 2, 8, 32>}, {pipeline_mode = #tpu.pipeline_mode<synchronous>, transform_indices = @transform_1, window_bounds = array<i64: 1, 32>}, {transform_indices = @transform_2, window_bounds = array<i64: 2, 1>}, {transform_indices = @transform_3, window_bounds = array<i64: 2, 8>}, {pipeline_mode = #tpu.pipeline_mode<synchronous>, transform_indices = @transform_4, window_bounds = array<i64: 8, 32>}]} {
    %c0_i32 = arith.constant 0 : i32
    %0 = arith.cmpi eq, %arg0, %c0_i32 : i32
    %1 = arith.extui %0 : i1 to i32
    %c0_i32_0 = arith.constant 0 : i32
    %2 = arith.cmpi ne, %1, %c0_i32_0 : i32
    scf.if %2 {
      %cst_17 = arith.constant 0.000000e+00 : f32
      %33 = vector.broadcast %cst_17 : f32 to vector<8x32xf32>
      %c0_18 = arith.constant 0 : index
      %c0_19 = arith.constant 0 : index
      %34 = vector.load %arg5[%c0_18, %c0_19] : memref<8x32xf32, #tpu.memory_space<vmem>>, vector<8x32xf32>
      tpu.vector_store %arg5[%c0_18, %c0_19], %33 {strides = array<i32>} : memref<8x32xf32, #tpu.memory_space<vmem>>, vector<8x32xf32>,
    } else {
    }
    %c0 = arith.constant 0 : index
    %c0_1 = arith.constant 0 : index
    %c0_2 = arith.constant 0 : index
    %3 = vector.load %arg1[%c0, %c0_1, %c0_2] : memref<2x8x32xf32, #tpu.memory_space<vmem>>, vector<2x8x32xf32>
    %c0_3 = arith.constant 0 : index
    %c0_4 = arith.constant 0 : index
    %4 = vector.load %arg2[%c0_3, %c0_4] : memref<1x32xf32, #tpu.memory_space<vmem>>, vector<1x32xf32>
    %5 = vector.shape_cast %4 : vector<1x32xf32> to vector<1x1x32xf32>
    %6 = vector.broadcast %5 : vector<1x1x32xf32> to vector<2x8x32xf32>
    %7 = arith.mulf %3, %6 : vector<2x8x32xf32>
    %cst = arith.constant dense<0.000000e+00> : vector<2x8xf32>
    %8 = vector.multi_reduction <add>, %7, %cst [2] : vector<2x8x32xf32> to vector<2x8xf32>
    %c0_5 = arith.constant 0 : index
    %c0_6 = arith.constant 0 : index
    %9 = vector.load %arg3[%c0_5, %c0_6] : memref<2x1xi32, #tpu.memory_space<vmem>>, vector<2x1xi32>
    %10 = tpu.iota {dimensions = array<i32: 1>} : vector<2x8xi32>
    %11 = vector.broadcast %9 : vector<2x1xi32> to vector<2x8xi32>
    %12 = arith.cmpi slt, %10, %11 : vector<2x8xi32>
    %cst_7 = arith.constant 0xFF800000 : f32
    %13 = vector.broadcast %cst_7 : f32 to vector<2x8xf32>
    %14 = arith.select %12, %8, %13 : vector<2x8xi1>, vector<2x8xf32>
    %cst_8 = arith.constant dense<0xFF800000> : vector<2xf32>
    %15 = vector.multi_reduction <maximumf>, %14, %cst_8 [1] : vector<2x8xf32> to vector<2xf32>
    %16 = vector.shape_cast %15 : vector<2xf32> to vector<2x1xf32>
    %17 = vector.broadcast %16 : vector<2x1xf32> to vector<2x8xf32>
    %18 = arith.subf %14, %17 : vector<2x8xf32>
    %19 = math.exp %18 : vector<2x8xf32>
    %cst_9 = arith.constant dense<0.000000e+00> : vector<2xf32>
    %20 = vector.multi_reduction <add>, %19, %cst_9 [1] : vector<2x8xf32> to vector<2xf32>
    %21 = vector.shape_cast %20 : vector<2xf32> to vector<2x1xf32>
    %22 = tpu.reciprocal %21 {approx = true} : vector<2x1xf32> -> vector<2x1xf32>
    %23 = vector.broadcast %22 : vector<2x1xf32> to vector<2x8xf32>
    %24 = arith.mulf %19, %23 : vector<2x8xf32>
    %c0_10 = arith.constant 0 : index
    %c0_11 = arith.constant 0 : index
    %25 = vector.load %arg4[%c0_10, %c0_11] : memref<2x8xf32, #tpu.memory_space<vmem>>, vector<2x8xf32>
    tpu.vector_store %arg4[%c0_10, %c0_11], %24 {strides = array<i32>} : memref<2x8xf32, #tpu.memory_space<vmem>>, vector<2x8xf32>,
    %c0_12 = arith.constant 0 : index
    %c0_13 = arith.constant 0 : index
    %26 = vector.load %arg5[%c0_12, %c0_13] : memref<8x32xf32, #tpu.memory_space<vmem>>, vector<8x32xf32>
    %27 = vector.shape_cast %24 : vector<2x8xf32> to vector<2x8x1xf32>
    %28 = vector.broadcast %27 : vector<2x8x1xf32> to vector<2x8x32xf32>
    %29 = arith.mulf %3, %28 : vector<2x8x32xf32>
    %cst_14 = arith.constant dense<0.000000e+00> : vector<8x32xf32>
    %30 = vector.multi_reduction <add>, %29, %cst_14 [0] : vector<2x8x32xf32> to vector<8x32xf32>
    %31 = arith.addf %26, %30 : vector<8x32xf32>
    %c0_15 = arith.constant 0 : index
    %c0_16 = arith.constant 0 : index
    %32 = vector.load %arg5[%c0_15, %c0_16] : memref<8x32xf32, #tpu.memory_space<vmem>>, vector<8x32xf32>
    tpu.vector_store %arg5[%c0_15, %c0_16], %31 {strides = array<i32>} : memref<8x32xf32, #tpu.memory_space<vmem>>, vector<8x32xf32>,
    return
  }
  func.func @transform_0(%arg0: i32) -> (i32, i32, i32) {
    %c0_i32 = arith.constant 0 : i32
    %c0_i32_0 = arith.constant 0 : i32
    %c0_i32_1 = arith.constant 0 : i32
    return %arg0, %c0_i32, %c0_i32_0 : i32, i32, i32
  }
  func.func @transform_1(%arg0: i32) -> (i32, i32) {
    %c0_i32 = arith.constant 0 : i32
    %c0_i32_0 = arith.constant 0 : i32
    %c0_i32_1 = arith.constant 0 : i32
    return %c0_i32, %c0_i32_0 : i32, i32
  }
  func.func @transform_2(%arg0: i32) -> (i32, i32) {
    %c0_i32 = arith.constant 0 : i32
    %c0_i32_0 = arith.constant 0 : i32
    return %arg0, %c0_i32 : i32, i32
  }
  func.func @transform_3(%arg0: i32) -> (i32, i32) {
    %c0_i32 = arith.constant 0 : i32
    %c0_i32_0 = arith.constant 0 : i32
    return %arg0, %c0_i32 : i32, i32
  }
  func.func @transform_4(%arg0: i32) -> (i32, i32) {
    %c0_i32 = arith.constant 0 : i32
    %c0_i32_0 = arith.constant 0 : i32
    %c0_i32_1 = arith.constant 0 : i32
    return %c0_i32, %c0_i32_0 : i32, i32
  }
}

</mosaic_0001>

<llo_original>
// kernel: tpu_custom_call.1
$region0: #{tpu_custom_call.1}
  #allocation0 [shape = 'u32[]', space=smem, size = 0x4, offset = 0x4, fixed_abs, tag = 'smem constant byte address 0x4 - core index']
  #allocation1 [shape = 'u32[144,128]{1,0:T(1,128)}', space=vmem, size = 0x12000, scoped, tag = 'internal scratch']
  %s0 = inlined_call_operand.hbm [shape: f32[2,8,32], index: 0, kind: input, shape index: {}]
  %s1 = inlined_call_operand.vmem [shape: f32[1,32], index: 1, kind: input, shape index: {}]
  %s2 = inlined_call_operand.vmem [shape: s32[2,1], index: 2, kind: input, shape index: {}]
  %s3 = inlined_call_operand.hbm [shape: f32[2,8], index: 3, kind: output, shape index: {0}]
  %s4 = inlined_call_operand.hbm [shape: f32[8,32], index: 4, kind: output, shape index: {1}]
  %5 = xla_tuple %s3, %s4
  %s6 = sld [smem:[#allocation0]]
  $region38: #{tpu_custom_call.1} parent=0
    _
  %s8 = ssub.s32 1, %s6
  %s9 = scalar_select 0, %s8, %s6
  $region1: #{tpu_custom_call.1} parent=0
    #allocation2 [shape = 'u8[8192]{0}', space=vmem, size = 0x2000, scoped, tag = 'input window, operand 0, single buffered']
    #allocation3 [shape = 's32[1]{0}', space=sflag, size = 0x4, scoped, tag = 'scoped memory for tpu_custom_call.1']
    #allocation4 [shape = 's32[1]{0}', space=sflag, size = 0x4, scoped, tag = 'scoped memory for tpu_custom_call.1']
    #allocation5 [shape = 'u8[1024]{0}', space=vmem, size = 0x400, scoped, tag = 'output window, operand 0, single buffered']
    #allocation6 [shape = 'u8[4096]{0}', space=vmem, size = 0x1000, scoped, tag = 'output window, operand 1, single buffered']
    #allocation7 [shape = 's32[1]{0}', space=sflag, size = 0x4, scoped, tag = 'scoped memory for tpu_custom_call.1']
    %10 = vsyncpa [#allocation3], 0
    %11 = vsyncpa [#allocation4], 0
    %12 = vsyncpa [#allocation7], 0
    // Predicated region
    $region2: #{tpu_custom_call.1} parent=1 // pred_check
      _
    $region3: #{tpu_custom_call.1} parent=1 // pred_check_branch
      %14 = sbr.rel (0) target = $region5
    $region4: #{tpu_custom_call.1} parent=1 // pred_region
      %s16 = ssub.s32 256, 256
      %17 = vsyncadd [#allocation3], %s16
      %s18 = sshll.u32 [#allocation2], 4
      %s19 = int_to_ptr.vmem [resolvable:$true] %s18
      %24 = dma.hbm_to_vmem [thread:$0]  %s0, 256, %s19, [#allocation3], 128, 128, 8
    $region5: #{tpu_custom_call.1} parent=1 // pred_fallthru
      _
    // Predicated region
    $region6: #{tpu_custom_call.1} parent=1 // pred_check
      _
    $region7: #{tpu_custom_call.1} parent=1 // pred_check_branch
      %26 = sbr.rel (0) target = $region9
    $region8: #{tpu_custom_call.1} parent=1 // pred_region
      _
    $region9: #{tpu_custom_call.1} parent=1 // pred_fallthru
      _
    // Predicated region
    $region10: #{tpu_custom_call.1} parent=1 // pred_check
      _
    $region11: #{tpu_custom_call.1} parent=1 // pred_check_branch
      %28 = sbr.rel (0) target = $region13
    $region12: #{tpu_custom_call.1} parent=1 // pred_region
      _
    $region13: #{tpu_custom_call.1} parent=1 // pred_fallthru
      _
    // Predicated region
    $region14: #{tpu_custom_call.1} parent=1 // pred_check
      _
    $region15: #{tpu_custom_call.1} parent=1 // pred_check_branch
      %30 = sbr.rel (0) target = $region17
    $region16: #{tpu_custom_call.1} parent=1 // pred_region
      %31 = dma.done [#allocation3], 256
    $region17: #{tpu_custom_call.1} parent=1 // pred_fallthru
      _
    %p32 = scmp.eq.s32.totalorder 0, 0
    // Predicated region
    $region18: #{tpu_custom_call.1} parent=1 // pred_check
      %p33 = pneg %p32
    $region19: #{tpu_custom_call.1} parent=1 // pred_check_branch
      %35 = sbr.rel (%p33) target = $region21
    $region20: #{tpu_custom_call.1} parent=1 // pred_region
      %vm36 = vcmask 261120
      %37 = vst.msk [vmem:[#allocation6] sm:$0xff] %vm36, 0.0
    $region21: #{tpu_custom_call.1} parent=1 // pred_fallthru
      _
    %v38 = vld [vmem:[#allocation2] sm:$0xff]
    %v39 = vld [vmem:[#allocation2 + $0x8] sm:$0xff]
    %v40 = vld [vmem:[%s1] sm:$0x1]
    %v42 = vlaneseq
    %v43 = vshrl.u32 %v42, 7
    %v44 = vsub.s32 0, %v43
    %v45 = vrot.slane %v40, %v44
    %v47 = vmul.f32 %v38, %v45
    %v48 = vmul.f32 %v39, %v45
    %vm49 = vcmask 261120
    %v50 = vsel %vm49, %v47, 0.0
    %51 = vadd.xlane.f32.xlu0 %v50
    %v52 = vpop.xlane.xlu0 %51
    %v53 = vsel %vm49, %v48, 0.0
    %54 = vadd.xlane.f32.xlu0 %v53
    %v55 = vpop.xlane.xlu0 %54
    %v56 = vld [vmem:[%s2] sm:$0x3]
    %v57 = vlaneseq
    %v58 = vand.u32 %v57, 127
    %59 = vset.pattern.permute.xlu0 0
    %60 = vperm.xlu0 %59, %v56
    %v61 = vpop.permute.xlu0 %60
    %vm62 = vcmp.lt.s32.totalorder %v58, %v61
    %v65 = vlaneseq
    %v66 = vshrl.u32 %v65, 7
    %v67 = vsub.s32 %v58, %v66
    %v68 = vrot.slane %v52, %v67
    %v69 = vlaneseq
    %v70 = vshrl.u32 %v69, 7
    %v71 = vsub.s32 %v58, %v70
    %v72 = vrot.slane %v55, %v71
    %vm73 = vcmask 1041409
    %v74 = vsel %vm73, %v72, %v68
    %v76 = vsel %vm62, %v74, -inf
    %vm77 = vcmask 58368
    %v78 = vsel %vm77, %v76, -inf
    %79 = vmax.xlane.f32.xlu0 %v78
    %v80 = vpop.xlane.xlu0 %79
    %v81 = vsub.f32 %v76, %v80
    %v82 = vmul.f32 %v81, 1.442695
    %v83 = vpow.pop %v82
    %v84 = vsel %vm77, %v83, 0.0
    %85 = vadd.xlane.f32.xlu0 %v84
    %v86 = vpop.xlane.xlu0 %85
    %v87 = vrcp.pop %v86
    %v88 = vmul.f32 %v83, %v87
    %89 = vst.msk [vmem:[#allocation5] sm:$0x3] %vm77, %v88
    %v90 = vld [vmem:[#allocation6] sm:$0xff]
    %v91 = vlaneseq
    %v92 = vshrl.u32 %v91, 7
    %v93 = vsub.s32 0, %v92
    %v94 = vrot.slane %v88, %v93
    %96 = vbcast.lane.b32.xlu0 %v94, 256
    %v97 = vpop.permute.xlu0 %96
    %v98 = vlaneseq
    %v99 = vshrl.u32 %v98, 7
    %v100 = vsub.s32 1, %v99
    %v101 = vrot.slane %v88, %v100
    %103 = vbcast.lane.b32.xlu0 %v101, 256
    %v104 = vpop.permute.xlu0 %103
    %v105 = vmul.f32 %v38, %v97
    %v106 = vmul.f32 %v39, %v104
    %v107 = vsel %vm49, %v105, 0.0
    %v108 = vsel %vm49, %v106, 0.0
    %v109 = vadd.f32 %v107, %v108
    %v110 = vadd.f32 %v90, %v109
    %111 = vst.msk [vmem:[#allocation6] sm:$0xff] %vm49, %v110
    // Predicated region
    $region22: #{tpu_custom_call.1} parent=1 // pred_check
      _
    $region23: #{tpu_custom_call.1} parent=1 // pred_check_branch
      %113 = sbr.rel (0) target = $region25
    $region24: #{tpu_custom_call.1} parent=1 // pred_region
      %s115 = ssub.s32 32, 32
      %116 = vsyncadd [#allocation4], %s115
      %s118 = sshll.u32 [#allocation5], 4
      %s119 = int_to_ptr.vmem [resolvable:$true] %s118
      %121 = dma.vmem_to_hbm [thread:$0]  %s119, 32, %s3, [#allocation4]
    $region25: #{tpu_custom_call.1} parent=1 // pred_fallthru
      _
    // Predicated region
    $region26: #{tpu_custom_call.1} parent=1 // pred_check
      _
    $region27: #{tpu_custom_call.1} parent=1 // pred_check_branch
      %123 = sbr.rel (0) target = $region29
    $region28: #{tpu_custom_call.1} parent=1 // pred_region
      %s125 = ssub.s32 128, 128
      %126 = vsyncadd [#allocation7], %s125
      %s128 = sshll.u32 [#allocation6], 4
      %s129 = int_to_ptr.vmem [resolvable:$true] %s128
      %131 = dma.vmem_to_hbm [thread:$0]  %s129, 128, %s4, [#allocation7]
    $region29: #{tpu_custom_call.1} parent=1 // pred_fallthru
      _
    // Predicated region
    $region30: #{tpu_custom_call.1} parent=1 // pred_check
      _
    $region31: #{tpu_custom_call.1} parent=1 // pred_check_branch
      %133 = sbr.rel (0) target = $region33
    $region32: #{tpu_custom_call.1} parent=1 // pred_region
      %134 = dma.done [#allocation4], 32
    $region33: #{tpu_custom_call.1} parent=1 // pred_fallthru
      _
    // Predicated region
    $region34: #{tpu_custom_call.1} parent=1 // pred_check
      _
    $region35: #{tpu_custom_call.1} parent=1 // pred_check_branch
      %136 = sbr.rel (0) target = $region37
    $region36: #{tpu_custom_call.1} parent=1 // pred_region
      %137 = dma.done [#allocation7], 128
    $region37: #{tpu_custom_call.1} parent=1 // pred_fallthru
      _
    %138 = vsyncpa [#allocation3], 1
    %139 = vsyncpa [#allocation4], 1
    %140 = vsyncpa [#allocation7], 1

</llo_original>
